<compile_context>
chip_gen: v7x
topology: tpu7x:2x2x1
jax: 0.10.0
libtpu: 0.0.40
codegen_flags: <defaults>
</compile_context>

<pallas_src>
import functools
import math

import jax
import jax.numpy as jnp
from jax.experimental import pallas as pl
from jax.experimental.pallas import tpu as pltpu

_BN_EPS = 1e-5
_VMEM_LIMIT = 32 * 1024 * 1024  # explicit scoped-VMEM budget, safe on v5e/v6e/v7x


def _round_up(x, m):
    return ((x + m - 1) // m) * m


# ----------------------------------------------------------------------------
# Pallas kernels: fused matmul + bias (+ residual) + ReLU epilogue.
# Single full-K block per (i, j) grid point -> no reduction axis, no scratch.
# ----------------------------------------------------------------------------
def _mm_bias_kernel(a_ref, b_ref, t_ref, o_ref, *, relu):
    acc = jnp.dot(a_ref[...], b_ref[...], preferred_element_type=jnp.float32)
    out = acc + t_ref[...]
    if relu:
        out = jnp.maximum(out, 0.0)
    o_ref[...] = out.astype(o_ref.dtype)


def _mm_bias_res_kernel(a_ref, b_ref, t_ref, r_ref, o_ref, *, relu):
    acc = jnp.dot(a_ref[...], b_ref[...], preferred_element_type=jnp.float32)
    out = acc + t_ref[...] + r_ref[...].astype(jnp.float32)
    if relu:
        out = jnp.maximum(out, 0.0)
    o_ref[...] = out.astype(o_ref.dtype)


def matmul_bias(a, b, bias, *, relu, residual=None, out_dtype=jnp.bfloat16):
    """out = relu?(a @ b + bias [+ residual]).

    a: (M, K) activations (cast to bf16, padded here).
    b: (Kp, Np) pre-padded / pre-cast bf16 weight matrix (BN scale folded in).
    bias: (1, Np) f32.  residual: optional (M, N) activations (same N as out).
    """
    M, K = a.shape
    Kp, Np = b.shape
    assert Kp >= K and Kp % 8 == 0

    # M-matched row tile (tiny late-stage M values are no longer padded to 128);
    # cap at 256 so the double-buffered full-K A tile stays small.
    tm = min(_round_up(max(M, 1), 8), 256)
    Mp = _round_up(M, tm)
    # Lane-dense N tile: single block up to 256, else 256-wide so the
    # 512-/1024-wide layers keep >=2 parallel blocks (v7x 2 TCs, v6e 256 MXU).
    tn = Np if Np <= 256 else 256
    assert Np % tn == 0

    a_p = a.astype(jnp.bfloat16)
    if Mp != M or Kp != K:
        a_p = jnp.pad(a_p, ((0, Mp - M), (0, Kp - K)))

    args = [a_p, b, bias]
    in_specs = [
        pl.BlockSpec((tm, Kp), lambda i, j: (i, 0)),   # A row-tile, full K
        pl.BlockSpec((Kp, tn), lambda i, j: (0, j)),   # B full-K column-tile
        pl.BlockSpec((1, tn), lambda i, j: (0, j)),    # folded BN bias / fc bias
    ]
    if residual is not None:
        r = residual.astype(jnp.bfloat16)
        if r.shape != (Mp, Np):
            r = jnp.pad(r, ((0, Mp - r.shape[0]), (0, Np - r.shape[1])))
        args.append(r)
        in_specs.append(pl.BlockSpec((tm, tn), lambda i, j: (i, j)))
        kernel = functools.partial(_mm_bias_res_kernel, relu=relu)
    else:
        kernel = functools.partial(_mm_bias_kernel, relu=relu)

    out = pl.pallas_call(
        kernel,
        out_shape=jax.ShapeDtypeStruct((Mp, Np), out_dtype),
        grid_spec=pltpu.PrefetchScalarGridSpec(
            num_scalar_prefetch=0,
            grid=(Mp // tm, Np // tn),
            in_specs=in_specs,
            out_specs=pl.BlockSpec((tm, tn), lambda i, j: (i, j)),
        ),
        compiler_params=pltpu.CompilerParams(
            dimension_semantics=("parallel", "parallel"),
            vmem_limit_bytes=_VMEM_LIMIT),
    )(*args)
    if Mp != M:
        out = out[:M]
    return out  # (M, Np)


# ----------------------------------------------------------------------------
# Conv glue (im2col, pooling)
# ----------------------------------------------------------------------------
def _im2col(x, kh, kw, stride, pad):
    # x: NHWC bf16 -> (N*OH*OW, C*KH*KW); column order matches the PyTorch
    # (OC, C, KH, KW) weight flattening (C outermost, then KH, KW).
    # TODO(synk): replace with an implicit-GEMM Pallas conv (in-kernel tap loop
    # over the padded NHWC activation) to avoid materializing the 9x/49x
    # expanded patch matrix at real image resolutions.
    N, H, W, C = x.shape
    xp = jnp.pad(x, ((0, 0), (pad, pad), (pad, pad), (0, 0)))
    OH = (H + 2 * pad - kh) // stride + 1
    OW = (W + 2 * pad - kw) // stride + 1
    cols = []
    for i in range(kh):
        for j in range(kw):
            cols.append(xp[:, i:i + stride * OH:stride, j:j + stride * OW:stride, :])
    patches = jnp.stack(cols, axis=3)                  # (N, OH, OW, KH*KW, C)
    patches = jnp.transpose(patches, (0, 1, 2, 4, 3))  # (N, OH, OW, C, KH*KW)
    return patches.reshape(N * OH * OW, C * kh * kw), OH, OW


def conv_bn(x, layer, *, relu, residual=None):
    """x: NHWC bf16; layer holds pre-prepared bf16 weight matrix (BN-folded),
    f32 bias, and static kh/kw/stride/pad. Optional residual fused in epilogue."""
    N = x.shape[0]
    a, OH, OW = _im2col(x, layer["kh"], layer["kw"], layer["stride"], layer["pad"])
    res = None
    if residual is not None:
        res = residual.reshape(N * OH * OW, residual.shape[-1])
    out = matmul_bias(a, layer["w_mat"], layer["bias"], relu=relu,
                      residual=res, out_dtype=jnp.bfloat16)
    return out.reshape(N, OH, OW, out.shape[-1])


def maxpool_3x3_s2_p1(x):
    # TODO(synk): maxpool kept as plain-JAX glue (tiny op); hot path is the matmuls.
    N, H, W, C = x.shape
    xp = jnp.pad(x, ((0, 0), (1, 1), (1, 1), (0, 0)), constant_values=-jnp.inf)
    OH = (H + 2 - 3) // 2 + 1
    OW = (W + 2 - 3) // 2 + 1
    out = None
    for i in range(3):
        for j in range(3):
            s = xp[:, i:i + 2 * OH:2, j:j + 2 * OW:2, :]
            out = s if out is None else jnp.maximum(out, s)
    return out


# ----------------------------------------------------------------------------
# Deterministic synthetic parameters (ResNet-34 shapes) + one-time prep
# ----------------------------------------------------------------------------
class _KeyGen:
    def __init__(self, seed):
        self._key = jax.random.PRNGKey(seed)

    def __call__(self):
        self._key, sub = jax.random.split(self._key)
        return sub


def _init_conv(kg, oc, ic, k):
    std = 0.5 * math.sqrt(2.0 / (ic * k * k))
    return std * jax.random.normal(kg(), (oc, ic, k, k), jnp.float32)


def _init_bn(kg, c):
    return dict(
        gamma=1.0 + 0.1 * jax.random.normal(kg(), (c,), jnp.float32),
        beta=0.1 * jax.random.normal(kg(), (c,), jnp.float32),
        mean=0.1 * jax.random.normal(kg(), (c,), jnp.float32),
        var=1.0 + 0.5 * jax.random.uniform(kg(), (c,), jnp.float32),
    )


def init_resnet34_params(seed=0, in_channels=3, num_classes=1000):
    # TODO(synk): `pretrained=True` checkpoint cannot be loaded here; weights
    # are deterministic synthetic init with identical shapes.
    kg = _KeyGen(seed)
    params = {
        "conv1_w": _init_conv(kg, 64, in_channels, 7),
        "bn1": _init_bn(kg, 64),
        "layers": [],
    }
    cfg = [(64, 3, 1), (128, 4, 2), (256, 6, 2), (512, 3, 2)]  # ResNet-34
    in_planes = 64
    for planes, n_blocks, stride in cfg:
        stage = []
        for b in range(n_blocks):
            s = stride if b == 0 else 1
            blk = {
                "stride": s,
                "conv1_w": _init_conv(kg, planes, in_planes, 3),
                "bn1": _init_bn(kg, planes),
                "conv2_w": _init_conv(kg, planes, planes, 3),
                "bn2": _init_bn(kg, planes),
            }
            if s != 1 or in_planes != planes:
                blk["down_w"] = _init_conv(kg, planes, in_planes, 1)
                blk["down_bn"] = _init_bn(kg, planes)
            stage.append(blk)
            in_planes = planes
        params["layers"].append(stage)
    params["fc_w"] = 0.05 * jax.random.normal(kg(), (num_classes, 512), jnp.float32)
    params["fc_b"] = 0.05 * jax.random.normal(kg(), (num_classes,), jnp.float32)
    return params


def _prep_conv(w, bn, *, stride, pad):
    """Fold eval-mode BN scale into the conv weights, pre-transpose to (K, OC),
    pre-pad K to a multiple of 128, pre-cast to bf16. Bias stays f32."""
    # TODO(synk): eval-mode BatchNorm only (running stats folded); train-mode
    # batch-statistic BN is not modeled.
    OC, C, KH, KW = w.shape
    inv = bn["gamma"] / jnp.sqrt(bn["var"] + _BN_EPS)
    bias = bn["beta"] - bn["mean"] * inv
    w_sc = w * inv[:, None, None, None]
    mat = jnp.transpose(w_sc.reshape(OC, C * KH * KW))     # (K, OC)
    K = C * KH * KW
    Kp = _round_up(K, 128)
    mat = jnp.pad(mat, ((0, Kp - K), (0, 0))).astype(jnp.bfloat16)
    return dict(w_mat=mat, bias=bias.reshape(1, OC).astype(jnp.float32),
                kh=KH, kw=KW, stride=stride, pad=pad)


def _prep_fc(w, b):
    N, K = w.shape                                         # (1000, 512)
    Kp = _round_up(K, 128)
    Np = _round_up(N, 128)
    mat = jnp.transpose(w)                                 # (512, 1000)
    mat = jnp.pad(mat, ((0, Kp - K), (0, Np - N))).astype(jnp.bfloat16)
    bias = jnp.pad(b, (0, Np - N)).reshape(1, Np).astype(jnp.float32)
    return dict(w_mat=mat, bias=bias, n=N)


def prepare_params(raw):
    p = {"stem": _prep_conv(raw["conv1_w"], raw["bn1"], stride=2, pad=3)}
    layers = []
    for stage in raw["layers"]:
        blocks = []
        for blk in stage:
            entry = {
                "c1": _prep_conv(blk["conv1_w"], blk["bn1"],
                                 stride=blk["stride"], pad=1),
                "c2": _prep_conv(blk["conv2_w"], blk["bn2"], stride=1, pad=1),
            }
            if "down_w" in blk:
                entry["down"] = _prep_conv(blk["down_w"], blk["down_bn"],
                                           stride=blk["stride"], pad=0)
            blocks.append(entry)
        layers.append(blocks)
    p["layers"] = layers
    p["fc"] = _prep_fc(raw["fc_w"], raw["fc_b"])
    return p


# ----------------------------------------------------------------------------
# Forward
# ----------------------------------------------------------------------------
def basic_block(x, blk):
    out = conv_bn(x, blk["c1"], relu=True)
    if "down" in blk:
        identity = conv_bn(x, blk["down"], relu=False)
    else:
        identity = x
    # Residual add + ReLU fused into the second conv's matmul epilogue.
    return conv_bn(out, blk["c2"], relu=True, residual=identity)


def resnet34_forward(x_nchw, params):
    x = jnp.transpose(x_nchw, (0, 2, 3, 1)).astype(jnp.bfloat16)  # NCHW -> NHWC bf16
    x = conv_bn(x, params["stem"], relu=True)
    x = maxpool_3x3_s2_p1(x)
    for stage in params["layers"]:
        for blk in stage:
            x = basic_block(x, blk)
    feat = jnp.mean(x.astype(jnp.float32), axis=(1, 2))           # (N, 512)
    logits = matmul_bias(feat.astype(jnp.bfloat16), params["fc"]["w_mat"],
                         params["fc"]["bias"], relu=False, out_dtype=jnp.float32)
    return logits[:, :params["fc"]["n"]]                          # (N, 1000)


if __name__ == "__main__":
    raw = init_resnet34_params(seed=0, in_channels=3, num_classes=1000)
    params = prepare_params(raw)
    x = jax.random.normal(jax.random.PRNGKey(0), (2, 3, 32, 32), jnp.float32)
    logits = resnet34_forward(x, params)
    logits = jax.block_until_ready(logits)
    assert logits.shape == (2, 1000), logits.shape
    assert bool(jnp.all(jnp.isfinite(logits)))
    print("KERNEL_OK")
</pallas_src>

<mosaic_0001>
module attributes {stable_mosaic.version = 11 : i64} {
  func.func @_mm_bias_kernel(%arg0: i32, %arg1: i32, %arg2: memref<256x256xbf16, #tpu.memory_space<vmem>>, %arg3: memref<256x64xbf16, #tpu.memory_space<vmem>>, %arg4: memref<1x64xf32, #tpu.memory_space<vmem>>, %arg5: memref<256x64xbf16, #tpu.memory_space<vmem>>) attributes {dimension_semantics = [#tpu.dimension_semantics<parallel>, #tpu.dimension_semantics<parallel>], iteration_bounds = array<i64: 2, 1>, scalar_prefetch = 0 : i64, scratch_operands = 0 : i64, tpu.core_type = #tpu.core_type<tc>, window_params = [{transform_indices = @transform_0, window_bounds = array<i64: 256, 256>}, {transform_indices = @transform_1, window_bounds = array<i64: 256, 64>}, {transform_indices = @transform_2, window_bounds = array<i64: 1, 64>}, {transform_indices = @transform_3, window_bounds = array<i64: 256, 64>}]} {
    %c0 = arith.constant 0 : index
    %c0_0 = arith.constant 0 : index
    %0 = vector.load %arg2[%c0, %c0_0] : memref<256x256xbf16, #tpu.memory_space<vmem>>, vector<256x256xbf16>
    %c0_1 = arith.constant 0 : index
    %c0_2 = arith.constant 0 : index
    %1 = vector.load %arg3[%c0_1, %c0_2] : memref<256x64xbf16, #tpu.memory_space<vmem>>, vector<256x64xbf16>
    %cst = arith.constant dense<0.000000e+00> : vector<256x64xf32>
    %2 = tpu.matmul %0, %1, %cst {dimension_numbers = #tpu.dot_dimension_numbers<[1], [0], [0], [1], [0, 0, 1, 1], [], []>} : vector<256x256xbf16>, vector<256x64xbf16>, vector<256x64xf32> -> vector<256x64xf32>
    %c0_3 = arith.constant 0 : index
    %c0_4 = arith.constant 0 : index
    %3 = vector.load %arg4[%c0_3, %c0_4] : memref<1x64xf32, #tpu.memory_space<vmem>>, vector<1x64xf32>
    %4 = vector.broadcast %3 : vector<1x64xf32> to vector<256x64xf32>
    %5 = arith.addf %2, %4 : vector<256x64xf32>
    %cst_5 = arith.constant 0.000000e+00 : f32
    %6 = vector.broadcast %cst_5 : f32 to vector<256x64xf32>
    %7 = arith.maximumf %5, %6 : vector<256x64xf32>
    %8 = arith.truncf %7 : vector<256x64xf32> to vector<256x64xbf16>
    %c0_6 = arith.constant 0 : index
    %c0_7 = arith.constant 0 : index
    %9 = vector.load %arg5[%c0_6, %c0_7] : memref<256x64xbf16, #tpu.memory_space<vmem>>, vector<256x64xbf16>
    tpu.vector_store %arg5[%c0_6, %c0_7], %8 {strides = array<i32>} : memref<256x64xbf16, #tpu.memory_space<vmem>>, vector<256x64xbf16>,
    return
  }
  func.func @transform_0(%arg0: i32, %arg1: i32) -> (i32, i32) {
    %c0_i32 = arith.constant 0 : i32
    %c0_i32_0 = arith.constant 0 : i32
    return %arg0, %c0_i32 : i32, i32
  }
  func.func @transform_1(%arg0: i32, %arg1: i32) -> (i32, i32) {
    %c0_i32 = arith.constant 0 : i32
    %c0_i32_0 = arith.constant 0 : i32
    return %c0_i32, %arg1 : i32, i32
  }
  func.func @transform_2(%arg0: i32, %arg1: i32) -> (i32, i32) {
    %c0_i32 = arith.constant 0 : i32
    %c0_i32_0 = arith.constant 0 : i32
    return %c0_i32, %arg1 : i32, i32
  }
  func.func @transform_3(%arg0: i32, %arg1: i32) -> (i32, i32) {
    %c0_i32 = arith.constant 0 : i32
    return %arg0, %arg1 : i32, i32
  }
}

</mosaic_0001>

<llo_original>
// kernel: tpu_custom_call.1
$region0: #{tpu_custom_call.1}
  #allocation0 [shape = 'u32[]', space=smem, size = 0x4, offset = 0x4, fixed_abs, tag = 'smem constant byte address 0x4 - core index']
  #allocation1 [shape = 'u32[144,128]{1,0:T(1,128)}', space=vmem, size = 0x12000, scoped, tag = 'internal scratch']
  %s0 = inlined_call_operand.hbm [shape: bf16[512,256], index: 0, kind: input, shape index: {}]
  %s1 = inlined_call_operand.vmem [shape: bf16[256,64], index: 1, kind: input, shape index: {}]
  %s2 = inlined_call_operand.vmem [shape: f32[1,64], index: 2, kind: input, shape index: {}]
  %s3 = inlined_call_operand.vmem [shape: bf16[512,64], index: 3, kind: output, shape index: {}]
  %s4 = sld [smem:[#allocation0]]
  $region49: #{tpu_custom_call.1} parent=0
    _
  %s6 = ssub.s32 1, %s4
  %s7 = scalar_select 0, %s6, %s4
  $region1: #{tpu_custom_call.1} parent=0
    #allocation2 [shape = 'u8[262144]{0}', space=vmem, size = 0x40000, scoped, tag = 'input window, operand 0']
    #allocation3 [shape = 's32[2]{0}', space=sflag, size = 0x8, scoped, tag = 'scoped memory for tpu_custom_call.1']
    %8 = vsyncpa [#allocation3], 0
    %s9 = scalar_lea.sflag [#allocation3], 1
    %10 = vsyncpa %s9, 0
    loop: start=0, step=1, limit=4
    $region2: #{tpu_custom_call.1} parent=1 // loop_pre_header
      _
    $region3: #{tpu_custom_call.1} parent=1 // loop_header
      %s12 = sphi 0, %s16
      %p13 = scmp.ge.s32.totalorder %s12, 4
      %s19 = sphi 0, %s31
      %s20 = sphi 0, %s27
      %s21 = sphi 0, %s19
      %s22 = sphi 0, %s20
      %s23 = sphi 0, %s21
      %s24 = sphi 0, %s22
      %s34 = sphi 0, %s36
      %s37 = sphi 0, %s34
      %s38 = sphi 0, %s37
      %s54 = sphi 0, %s38
      %s60 = sphi 0, %s62
      %s63 = sphi 0, %s60
      %s64 = sphi 0, %s63
      %s80 = sphi 0, %s64
      %s86 = sphi 0, %s88
      %s89 = sphi 0, %s86
      %s90 = sphi 0, %s89
      %s106 = sphi 0, %s90
      %s114 = sphi 0, %s116
      %s117 = sphi 0, %s114
      %s118 = sphi 0, %s117
      %s134 = sphi 0, %s118
    $region4: #{tpu_custom_call.1} parent=1 // loop_header_branch
      %15 = sbr.rel (%p13) target = $region8
    $region5: #{tpu_custom_call.1} parent=1 // loop_body
      %s17 = ssub.s32 %s12, 1
      %s18 = ssub.s32 %s12, 2
      %s25 = sadd.s32 1, %s20
      %p26 = scmp.ge.s32.totalorder %s25, 1
      %s27 = scalar_select %p26, 0, %s25
      %s28 = sadd.s32 1, %s19
      %s29 = scalar_select %p26, %s28, %s19
      %p30 = scmp.ge.s32.totalorder %s29, 2
      %s31 = scalar_select %p30, 0, %s29
      %s32 = ssub.s32 %s19, %s31
      %p33 = scmp.eq.s32.totalorder %s32, 0
      %s35 = sadd.s32 %s34, 1
      %s36 = scalar_select %p33, %s34, %s35
      %p39 = pneg %p33
      %p40 = scmp.eq.s32.totalorder %s12, 1
      %p41 = por %p39, %p40
      %p42 = scmp.ne.s32.totalorder %s34, %s37
      %p43 = scmp.eq.s32.totalorder %s12, 0
      %p44 = por %p42, %p43
      %p45 = scmp.ne.s32.totalorder %s34, %s37
      %p46 = scmp.eq.s32.totalorder %s17, 1
      %p47 = por %p45, %p46
      %p48 = scmp.ne.s32.totalorder %s37, %s38
      %p49 = scmp.eq.s32.totalorder %s17, 0
      %p50 = por %p48, %p49
      %p51 = scmp.ne.s32.totalorder %s37, %s38
      %p52 = scmp.eq.s32.totalorder %s18, 1
      %p53 = por %p51, %p52
      %p55 = scmp.ne.s32.totalorder %s38, %s54
      %p56 = scmp.eq.s32.totalorder %s18, 0
      %p57 = por %p55, %p56
      %s58 = ssub.s32 %s20, %s27
      %p59 = scmp.eq.s32.totalorder %s58, 0
      %s61 = sadd.s32 %s60, 1
      %s62 = scalar_select %p59, %s60, %s61
      %p65 = pneg %p59
      %p66 = scmp.eq.s32.totalorder %s12, 1
      %p67 = por %p65, %p66
      %p68 = scmp.ne.s32.totalorder %s60, %s63
      %p69 = scmp.eq.s32.totalorder %s12, 0
      %p70 = por %p68, %p69
      %p71 = scmp.ne.s32.totalorder %s60, %s63
      %p72 = scmp.eq.s32.totalorder %s17, 1
      %p73 = por %p71, %p72
      %p74 = scmp.ne.s32.totalorder %s63, %s64
      %p75 = scmp.eq.s32.totalorder %s17, 0
      %p76 = por %p74, %p75
      %p77 = scmp.ne.s32.totalorder %s63, %s64
      %p78 = scmp.eq.s32.totalorder %s18, 1
      %p79 = por %p77, %p78
      %p81 = scmp.ne.s32.totalorder %s64, %s80
      %p82 = scmp.eq.s32.totalorder %s18, 0
      %p83 = por %p81, %p82
      %s84 = ssub.s32 %s20, %s27
      %p85 = scmp.eq.s32.totalorder %s84, 0
      %s87 = sadd.s32 %s86, 1
      %s88 = scalar_select %p85, %s86, %s87
      %p91 = pneg %p85
      %p92 = scmp.eq.s32.totalorder %s12, 1
      %p93 = por %p91, %p92
      %p94 = scmp.ne.s32.totalorder %s86, %s89
      %p95 = scmp.eq.s32.totalorder %s12, 0
      %p96 = por %p94, %p95
      %p97 = scmp.ne.s32.totalorder %s86, %s89
      %p98 = scmp.eq.s32.totalorder %s17, 1
      %p99 = por %p97, %p98
      %p100 = scmp.ne.s32.totalorder %s89, %s90
      %p101 = scmp.eq.s32.totalorder %s17, 0
      %p102 = por %p100, %p101
      %p103 = scmp.ne.s32.totalorder %s89, %s90
      %p104 = scmp.eq.s32.totalorder %s18, 1
      %p105 = por %p103, %p104
      %p107 = scmp.ne.s32.totalorder %s90, %s106
      %p108 = scmp.eq.s32.totalorder %s18, 0
      %p109 = por %p107, %p108
      %s110 = ssub.s32 %s19, %s31
      %s111 = ssub.s32 %s20, %s27
      %s112 = sor.u32 %s110, %s111
      %p113 = scmp.eq.s32.totalorder %s112, 0
      %s115 = sadd.s32 %s114, 1
      %s116 = scalar_select %p113, %s114, %s115
      %p119 = pneg %p113
      %p120 = scmp.eq.s32.totalorder %s12, 1
      %p121 = por %p119, %p120
      %p122 = scmp.ne.s32.totalorder %s114, %s117
      %p123 = scmp.eq.s32.totalorder %s12, 0
      %p124 = por %p122, %p123
      %p125 = scmp.ne.s32.totalorder %s114, %s117
      %p126 = scmp.eq.s32.totalorder %s17, 1
      %p127 = por %p125, %p126
      %p128 = scmp.ne.s32.totalorder %s117, %s118
      %p129 = scmp.eq.s32.totalorder %s17, 0
      %p130 = por %p128, %p129
      %p131 = scmp.ne.s32.totalorder %s117, %s118
      %p132 = scmp.eq.s32.totalorder %s18, 1
      %p133 = por %p131, %p132
      %p135 = scmp.ne.s32.totalorder %s118, %s134
      %p136 = scmp.eq.s32.totalorder %s18, 0
      %p137 = por %p135, %p136
      %p138 = scmp.le.s32.totalorder 1, %s12
      %p139 = scmp.lt.s32.totalorder %s12, 3
      %p140 = pnand %p138, %p139
      %p141 = pneg %p140
      // Predicated region
      $region9: #{tpu_custom_call.1} parent=5 // pred_check
        _
      $region10: #{tpu_custom_call.1} parent=5 // pred_check_branch
        %143 = sbr.rel (%p140) target = $region12
      $region11: #{tpu_custom_call.1} parent=5 // pred_region
        %s144 = ssub.s32 %s12, 1
        // Predicated region
        $region13: #{tpu_custom_call.1} parent=11 // pred_check
          %p145 = pneg %p76
        $region14: #{tpu_custom_call.1} parent=11 // pred_check_branch
          %147 = sbr.rel (%p145) target = $region16
        $region15: #{tpu_custom_call.1} parent=11 // pred_region
          %p148 = scmp.lt.s32.totalorder %s22, 0
          %s149 = scalar_select %p148, %s22, 0
          %s150 = smul.addr %s149, 4
          %s151 = scalar_lea.vmem %s1, %s150
        $region16: #{tpu_custom_call.1} parent=11 // pred_fallthru
          _
        // Predicated region
        $region17: #{tpu_custom_call.1} parent=11 // pred_check
          %p152 = pneg %p102
        $region18: #{tpu_custom_call.1} parent=11 // pred_check_branch
          %154 = sbr.rel (%p152) target = $region20
        $region19: #{tpu_custom_call.1} parent=11 // pred_region
          %p155 = scmp.lt.s32.totalorder %s22, 0
          %s156 = scalar_select %p155, %s22, 0
          %s157 = scalar_lea.vmem %s2, %s156
        $region20: #{tpu_custom_call.1} parent=11 // pred_fallthru
          _
      $region12: #{tpu_custom_call.1} parent=5 // pred_fallthru
        _
      %p158 = scmp.lt.s32.totalorder %s12, 2
      // Predicated region
      $region21: #{tpu_custom_call.1} parent=5 // pred_check
        %p159 = pneg %p158
      $region22: #{tpu_custom_call.1} parent=5 // pred_check_branch
        %161 = sbr.rel (%p159) target = $region24
      $region23: #{tpu_custom_call.1} parent=5 // pred_region
        // Predicated region
        $region25: #{tpu_custom_call.1} parent=23 // pred_check
          %p162 = pneg %p44
        $region26: #{tpu_custom_call.1} parent=23 // pred_check_branch
          %164 = sbr.rel (%p162) target = $region28
        $region27: #{tpu_custom_call.1} parent=23 // pred_region
          %s165 = sand.u32 %s34, 1
          %s166 = scalar_lea.sflag [#allocation3], %s165
          %s167 = sand.u32 %s34, 1
          %s168 = smul.addr %s167, 256
          %s169 = scalar_lea.vmem [#allocation2], %s168
          %s170 = smul.u32 32, %s19
          %s172 = ssub.s32 4096, 4096
          %173 = vsyncadd %s166, %s172
          %s174 = smul.addr %s170, 2
          %s175 = smul.addr %s174, 64
          %s176 = scalar_lea.hbm %s0, %s175
          %s177 = sshll.u32 %s169, 4
          %s178 = int_to_ptr.vmem [resolvable:$true] %s177
          %183 = dma.hbm_to_vmem [thread:$0]  %s176, 4096, %s178, %s166, 128, 128, 8
        $region28: #{tpu_custom_call.1} parent=23 // pred_fallthru
          _
      $region24: #{tpu_custom_call.1} parent=5 // pred_fallthru
        _
      %p184 = scmp.le.s32.totalorder 1, %s12
      %p185 = scmp.lt.s32.totalorder %s12, 3
      %p186 = pnand %p184, %p185
      %p187 = pneg %p186
      // Predicated region
      $region29: #{tpu_custom_call.1} parent=5 // pred_check
        _
      $region30: #{tpu_custom_call.1} parent=5 // pred_check_branch
        %189 = sbr.rel (%p186) target = $region32
      $region31: #{tpu_custom_call.1} parent=5 // pred_region
        %s190 = ssub.s32 %s12, 1
        %s191 = sand.u32 %s37, 1
        %s192 = scalar_lea.sflag [#allocation3], %s191
        %s193 = sand.u32 %s37, 1
        %s194 = smul.addr %s193, 256
        %s195 = scalar_lea.vmem [#allocation2], %s194
        // Predicated region
        $region33: #{tpu_custom_call.1} parent=31 // pred_check
          %p196 = pneg %p50
        $region34: #{tpu_custom_call.1} parent=31 // pred_check_branch
          %198 = sbr.rel (%p196) target = $region36
        $region35: #{tpu_custom_call.1} parent=31 // pred_region
          %199 = dma.done %s192, 4096
        $region36: #{tpu_custom_call.1} parent=31 // pred_fallthru
          _
        %s200 = sand.u32 %s37, 1
        %s201 = scalar_lea.sflag [#allocation3], %s200
        %s202 = sand.u32 %s37, 1
        %s203 = smul.addr %s202, 256
        %s204 = scalar_lea.vmem [#allocation2], %s203
        %p205 = pneg %p50
        %p206 = pneg %p47
        %p207 = scmp.lt.s32.totalorder %s22, 0
        %s208 = scalar_select %p207, %s22, 0
        %s209 = smul.addr %s208, 4
        %s210 = scalar_lea.vmem %s1, %s209
        %p211 = pneg %p76
        %p212 = pneg %p73
        %p213 = scmp.lt.s32.totalorder %s22, 0
        %s214 = scalar_select %p213, %s22, 0
        %s215 = scalar_lea.vmem %s2, %s214
        %p216 = pneg %p102
        %p217 = pneg %p99
        %p218 = pneg %p130
        %p219 = pneg %p127
        %s220 = smul.u32 32, %s21
        %p221 = scmp.lt.s32.totalorder %s220, 63
        %s222 = scalar_select %p221, %s220, 63
        %p223 = scmp.lt.s32.totalorder %s22, 0
        %s224 = scalar_select %p223, %s22, 0
        %s225 = sadd.s32 %s224, %s222
        %s226 = smul.addr %s225, 4
        %s227 = scalar_lea.vmem %s3, %s226
        %s228 = smul.u32 32, %s21
        %p229 = scmp.lt.s32.totalorder %s22, 0
        %s230 = scalar_select %p229, %s22, 0
        %s231 = smul.addr %s230, 4
        %s232 = scalar_lea.vmem %s1, %s231
        %p233 = scmp.lt.s32.totalorder %s22, 0
        %s234 = scalar_select %p233, %s22, 0
        %s235 = scalar_lea.vmem %s2, %s234
        %s236 = smul.u32 32, %s21
        %p237 = scmp.lt.s32.totalorder %s236, 63
        %s238 = scalar_select %p237, %s236, 63
        %p239 = scmp.lt.s32.totalorder %s22, 0
        %s240 = scalar_select %p239, %s22, 0
        %s241 = sadd.s32 %s240, %s238
        %s242 = smul.addr %s241, 4
        %s243 = scalar_lea.vmem %s3, %s242
        %s244 = smul.u32 32, %s21
        %v246 = vld [vmem:[%s195] sm:$0xff]
        %v247 = vld [vmem:[%s195 + $0x8] sm:$0xff]
        %v248 = vld [vmem:[%s195 + $0x10] sm:$0xff]
        %v249 = vld [vmem:[%s195 + $0x18] sm:$0xff]
        %v250 = vld [vmem:[%s195 + $0x20] sm:$0xff]
        %v251 = vld [vmem:[%s195 + $0x28] sm:$0xff]
        %v252 = vld [vmem:[%s195 + $0x30] sm:$0xff]
        %v253 = vld [vmem:[%s195 + $0x38] sm:$0xff]
        %v254 = vld [vmem:[%s195 + $0x40] sm:$0xff]
        %v255 = vld [vmem:[%s195 + $0x48] sm:$0xff]
        %v256 = vld [vmem:[%s195 + $0x50] sm:$0xff]
        %v257 = vld [vmem:[%s195 + $0x58] sm:$0xff]
        %v258 = vld [vmem:[%s195 + $0x60] sm:$0xff]
        %v259 = vld [vmem:[%s195 + $0x68] sm:$0xff]
        %v260 = vld [vmem:[%s195 + $0x70] sm:$0xff]
        %v261 = vld [vmem:[%s195 + $0x78] sm:$0xff]
        %v262 = vld [vmem:[%s195 + $0x80] sm:$0xff]
        %v263 = vld [vmem:[%s195 + $0x88] sm:$0xff]
        %v264 = vld [vmem:[%s195 + $0x90] sm:$0xff]
        %v265 = vld [vmem:[%s195 + $0x98] sm:$0xff]
        %v266 = vld [vmem:[%s195 + $0xa0] sm:$0xff]
        %v267 = vld [vmem:[%s195 + $0xa8] sm:$0xff]
        %v268 = vld [vmem:[%s195 + $0xb0] sm:$0xff]
        %v269 = vld [vmem:[%s195 + $0xb8] sm:$0xff]
        %v270 = vld [vmem:[%s195 + $0xc0] sm:$0xff]
        %v271 = vld [vmem:[%s195 + $0xc8] sm:$0xff]
        %v272 = vld [vmem:[%s195 + $0xd0] sm:$0xff]
        %v273 = vld [vmem:[%s195 + $0xd8] sm:$0xff]
        %v274 = vld [vmem:[%s195 + $0xe0] sm:$0xff]
        %v275 = vld [vmem:[%s195 + $0xe8] sm:$0xff]
        %v276 = vld [vmem:[%s195 + $0xf0] sm:$0xff]
        %v277 = vld [vmem:[%s195 + $0xf8] sm:$0xff]
        %v278 = vld [vmem:[%s232] sm:$0xf]
        %v279 = vld [vmem:[%s232 + $0x4] sm:$0xf]
        %v280 = vld [vmem:[%s232 + $0x8] sm:$0xf]
        %v281 = vld [vmem:[%s232 + $0xc] sm:$0xf]
        %v282 = vld [vmem:[%s232 + $0x10] sm:$0xf]
        %v283 = vld [vmem:[%s232 + $0x14] sm:$0xf]
        %v284 = vld [vmem:[%s232 + $0x18] sm:$0xf]
        %v285 = vld [vmem:[%s232 + $0x1c] sm:$0xf]
        %v286 = vld [vmem:[%s232 + $0x20] sm:$0xf]
        %v287 = vld [vmem:[%s232 + $0x24] sm:$0xf]
        %v288 = vld [vmem:[%s232 + $0x28] sm:$0xf]
        %v289 = vld [vmem:[%s232 + $0x2c] sm:$0xf]
        %v290 = vld [vmem:[%s232 + $0x30] sm:$0xf]
        %v291 = vld [vmem:[%s232 + $0x34] sm:$0xf]
        %v292 = vld [vmem:[%s232 + $0x38] sm:$0xf]
        %v293 = vld [vmem:[%s232 + $0x3c] sm:$0xf]
        %v294 = vld [vmem:[%s232 + $0x40] sm:$0xf]
        %v295 = vld [vmem:[%s232 + $0x44] sm:$0xf]
        %v296 = vld [vmem:[%s232 + $0x48] sm:$0xf]
        %v297 = vld [vmem:[%s232 + $0x4c] sm:$0xf]
        %v298 = vld [vmem:[%s232 + $0x50] sm:$0xf]
        %v299 = vld [vmem:[%s232 + $0x54] sm:$0xf]
        %v300 = vld [vmem:[%s232 + $0x58] sm:$0xf]
        %v301 = vld [vmem:[%s232 + $0x5c] sm:$0xf]
        %v302 = vld [vmem:[%s232 + $0x60] sm:$0xf]
        %v303 = vld [vmem:[%s232 + $0x64] sm:$0xf]
        %v304 = vld [vmem:[%s232 + $0x68] sm:$0xf]
        %v305 = vld [vmem:[%s232 + $0x6c] sm:$0xf]
        %v306 = vld [vmem:[%s232 + $0x70] sm:$0xf]
        %v307 = vld [vmem:[%s232 + $0x74] sm:$0xf]
        %v308 = vld [vmem:[%s232 + $0x78] sm:$0xf]
        %v309 = vld [vmem:[%s232 + $0x7c] sm:$0xf]
        %v310 = vld [vmem:[%s235] sm:$0x1]
        %v312 = vlaneseq
        %v313 = vshrl.u32 %v312, 7
        %v314 = vsub.s32 0, %v313
        %v315 = vrot.slane %v310, %v314
        %v349 = vunpack.c.l.b16 %v246
        %v350 = vunpack.c.h.b16 %v246
        %v351 = vunpack.c.l.b16 %v247
        %v352 = vunpack.c.h.b16 %v247
        %v353 = vunpack.c.l.b16 %v248
        %v354 = vunpack.c.h.b16 %v248
        %v355 = vunpack.c.l.b16 %v249
        %v356 = vunpack.c.h.b16 %v249
        %v357 = vunpack.c.l.b16 %v250
        %v358 = vunpack.c.h.b16 %v250
        %v359 = vunpack.c.l.b16 %v251
        %v360 = vunpack.c.h.b16 %v251
        %v361 = vunpack.c.l.b16 %v252
        %v362 = vunpack.c.h.b16 %v252
        %v363 = vunpack.c.l.b16 %v253
        %v364 = vunpack.c.h.b16 %v253
        %v365 = vunpack.c.l.b16 %v254
        %v366 = vunpack.c.h.b16 %v254
        %v367 = vunpack.c.l.b16 %v255
        %v368 = vunpack.c.h.b16 %v255
        %v369 = vunpack.c.l.b16 %v256
        %v370 = vunpack.c.h.b16 %v256
        %v371 = vunpack.c.l.b16 %v257
        %v372 = vunpack.c.h.b16 %v257
        %v373 = vunpack.c.l.b16 %v258
        %v374 = vunpack.c.h.b16 %v258
        %v375 = vunpack.c.l.b16 %v259
        %v376 = vunpack.c.h.b16 %v259
        %v377 = vunpack.c.l.b16 %v260
        %v378 = vunpack.c.h.b16 %v260
        %v379 = vunpack.c.l.b16 %v261
        %v380 = vunpack.c.h.b16 %v261
        %v381 = vunpack.c.l.b16 %v262
        %v382 = vunpack.c.h.b16 %v262
        %v383 = vunpack.c.l.b16 %v263
        %v384 = vunpack.c.h.b16 %v263
        %v385 = vunpack.c.l.b16 %v264
        %v386 = vunpack.c.h.b16 %v264
        %v387 = vunpack.c.l.b16 %v265
        %v388 = vunpack.c.h.b16 %v265
        %v389 = vunpack.c.l.b16 %v266
        %v390 = vunpack.c.h.b16 %v266
        %v391 = vunpack.c.l.b16 %v267
        %v392 = vunpack.c.h.b16 %v267
        %v393 = vunpack.c.l.b16 %v268
        %v394 = vunpack.c.h.b16 %v268
        %v395 = vunpack.c.l.b16 %v269
        %v396 = vunpack.c.h.b16 %v269
        %v397 = vunpack.c.l.b16 %v270
        %v398 = vunpack.c.h.b16 %v270
        %v399 = vunpack.c.l.b16 %v271
        %v400 = vunpack.c.h.b16 %v271
        %v401 = vunpack.c.l.b16 %v272
        %v402 = vunpack.c.h.b16 %v272
        %v403 = vunpack.c.l.b16 %v273
        %v404 = vunpack.c.h.b16 %v273
        %v405 = vunpack.c.l.b16 %v274
        %v406 = vunpack.c.h.b16 %v274
        %v407 = vunpack.c.l.b16 %v275
        %v408 = vunpack.c.h.b16 %v275
        %v409 = vunpack.c.l.b16 %v276
        %v410 = vunpack.c.h.b16 %v276
        %v411 = vunpack.c.l.b16 %v277
        %v412 = vunpack.c.h.b16 %v277
        %v413 = vpack.c.b16 %v351, %v349
        %v414 = vpack.c.b16 %v352, %v350
        %v415 = vpack.c.b16 %v355, %v353
        %v416 = vpack.c.b16 %v356, %v354
        %v417 = vpack.c.b16 %v359, %v357
        %v418 = vpack.c.b16 %v360, %v358
        %v419 = vpack.c.b16 %v363, %v361
        %v420 = vpack.c.b16 %v364, %v362
        %v421 = vpack.c.b16 %v367, %v365
        %v422 = vpack.c.b16 %v368, %v366
        %v423 = vpack.c.b16 %v371, %v369
        %v424 = vpack.c.b16 %v372, %v370
        %v425 = vpack.c.b16 %v375, %v373
        %v426 = vpack.c.b16 %v376, %v374
        %v427 = vpack.c.b16 %v379, %v377
        %v428 = vpack.c.b16 %v380, %v378
        %v429 = vpack.c.b16 %v383, %v381
        %v430 = vpack.c.b16 %v384, %v382
        %v431 = vpack.c.b16 %v387, %v385
        %v432 = vpack.c.b16 %v388, %v386
        %v433 = vpack.c.b16 %v391, %v389
        %v434 = vpack.c.b16 %v392, %v390
        %v435 = vpack.c.b16 %v395, %v393
        %v436 = vpack.c.b16 %v396, %v394
        %v437 = vpack.c.b16 %v399, %v397
        %v438 = vpack.c.b16 %v400, %v398
        %v439 = vpack.c.b16 %v403, %v401
        %v440 = vpack.c.b16 %v404, %v402
        %v441 = vpack.c.b16 %v407, %v405
        %v442 = vpack.c.b16 %v408, %v406
        %v443 = vpack.c.b16 %v411, %v409
        %v444 = vpack.c.b16 %v412, %v410
        %v509 = vunpack.c.l.b16 %v278
        %v510 = vunpack.c.l.b16 %v279
        %v511 = vunpack.c.l.b16 %v280
        %v512 = vunpack.c.l.b16 %v281
        %v513 = vunpack.c.l.b16 %v282
        %v514 = vunpack.c.l.b16 %v283
        %v515 = vunpack.c.l.b16 %v284
        %v516 = vunpack.c.l.b16 %v285
        %v517 = vunpack.c.l.b16 %v286
        %v518 = vunpack.c.l.b16 %v287
        %v519 = vunpack.c.l.b16 %v288
        %v520 = vunpack.c.l.b16 %v289
        %v521 = vunpack.c.l.b16 %v290
        %v522 = vunpack.c.l.b16 %v291
        %v523 = vunpack.c.l.b16 %v292
        %v524 = vunpack.c.l.b16 %v293
        %v525 = vunpack.c.l.b16 %v294
        %v526 = vunpack.c.l.b16 %v295
        %v527 = vunpack.c.l.b16 %v296
        %v528 = vunpack.c.l.b16 %v297
        %v529 = vunpack.c.l.b16 %v298
        %v530 = vunpack.c.l.b16 %v299
        %v531 = vunpack.c.l.b16 %v300
        %v532 = vunpack.c.l.b16 %v301
        %v533 = vunpack.c.l.b16 %v302
        %v534 = vunpack.c.l.b16 %v303
        %v535 = vunpack.c.l.b16 %v304
        %v536 = vunpack.c.l.b16 %v305
        %v537 = vunpack.c.l.b16 %v306
        %v538 = vunpack.c.l.b16 %v307
        %v539 = vunpack.c.l.b16 %v308
        %v540 = vunpack.c.l.b16 %v309
        %v541 = vpack.c.b16 %v510, %v509
        %v542 = vpack.c.b16 %v512, %v511
        %v543 = vpack.c.b16 %v514, %v513
        %v544 = vpack.c.b16 %v516, %v515
        %v545 = vpack.c.b16 %v518, %v517
        %v546 = vpack.c.b16 %v520, %v519
        %v547 = vpack.c.b16 %v522, %v521
        %v548 = vpack.c.b16 %v524, %v523
        %v549 = vpack.c.b16 %v526, %v525
        %v550 = vpack.c.b16 %v528, %v527
        %v551 = vpack.c.b16 %v530, %v529
        %v552 = vpack.c.b16 %v532, %v531
        %v553 = vpack.c.b16 %v534, %v533
        %v554 = vpack.c.b16 %v536, %v535
        %v555 = vpack.c.b16 %v538, %v537
        %v556 = vpack.c.b16 %v540, %v539
        %573 = vmatprep.subr.bf16.mxu0 0
        %574 = vmatpush1.bf16.msra.mxu0 %v541
        %575 = vmatprep.subr.bf16.mxu0 0
        %576 = vmatpush1.bf16.msra.mxu0 %v542
        %577 = vmatprep.subr.bf16.mxu0 0
        %578 = vmatpush1.bf16.msra.mxu0 %v543
        %579 = vmatprep.subr.bf16.mxu0 0
        %580 = vmatpush1.bf16.msra.mxu0 %v544
        %581 = vmatprep.subr.bf16.mxu0 0
        %582 = vmatpush1.bf16.msra.mxu0 %v545
        %583 = vmatprep.subr.bf16.mxu0 0
        %584 = vmatpush1.bf16.msra.mxu0 %v546
        %585 = vmatprep.subr.bf16.mxu0 0
        %586 = vmatpush1.bf16.msra.mxu0 %v547
        %587 = vmatprep.subr.bf16.mxu0 0
        %588 = vmatpush1.bf16.msra.mxu0 %v548
        %589 = vmatprep.subr.bf16.mxu0 0
        %590 = vmatpush1.bf16.msra.mxu0 %v549
        %591 = vmatprep.subr.bf16.mxu0 0
        %592 = vmatpush1.bf16.msra.mxu0 %v550
        %593 = vmatprep.subr.bf16.mxu0 0
        %594 = vmatpush1.bf16.msra.mxu0 %v551
        %595 = vmatprep.subr.bf16.mxu0 0
        %596 = vmatpush1.bf16.msra.mxu0 %v552
        %597 = vmatprep.subr.bf16.mxu0 0
        %598 = vmatpush1.bf16.msra.mxu0 %v553
        %599 = vmatprep.subr.bf16.mxu0 0
        %600 = vmatpush1.bf16.msra.mxu0 %v554
        %601 = vmatprep.subr.bf16.mxu0 0
        %602 = vmatpush1.bf16.msra.mxu0 %v555
        %603 = vmatprep.subr.bf16.mxu0 0
        %604 = vmatpush1.bf16.msra.mxu0 %v556
        %605 = vmatprep.mubr.bf16.mxu0 %v414
        %606 = vmatmul.mubr.bf16.gmra.mrb[0].mxu0 %v413
        %v607 = vpop.f32.mrb[0].mxu0
        %v608 = vadd.f32 %v315, %v607
        %v609 = vpop.f32.mrb[0].mxu0
        %v610 = vpop.f32.mrb[0].mxu0
        %v611 = vadd.f32 %v315, %v610
        %v612 = vpop.f32.mrb[0].mxu0
        %613 = vmatprep.mubr.bf16.mxu0 %v416
        %614 = vmatmul.mubr.bf16.gmra.mrb[0].mxu0 %v415
        %v615 = vpop.f32.mrb[0].mxu0
        %v616 = vadd.f32 %v315, %v615
        %v617 = vpop.f32.mrb[0].mxu0
        %v618 = vpop.f32.mrb[0].mxu0
        %v619 = vadd.f32 %v315, %v618
        %v620 = vpop.f32.mrb[0].mxu0
        %621 = vmatprep.mubr.bf16.mxu0 %v418
        %622 = vmatmul.mubr.bf16.gmra.mrb[0].mxu0 %v417
        %v623 = vpop.f32.mrb[0].mxu0
        %v624 = vadd.f32 %v315, %v623
        %v625 = vpop.f32.mrb[0].mxu0
        %v626 = vpop.f32.mrb[0].mxu0
        %v627 = vadd.f32 %v315, %v626
        %v628 = vpop.f32.mrb[0].mxu0
        %629 = vmatprep.mubr.bf16.mxu0 %v420
        %630 = vmatmul.mubr.bf16.gmra.mrb[0].mxu0 %v419
        %v631 = vpop.f32.mrb[0].mxu0
        %v632 = vadd.f32 %v315, %v631
        %v633 = vpop.f32.mrb[0].mxu0
        %v634 = vpop.f32.mrb[0].mxu0
        %v635 = vadd.f32 %v315, %v634
        %v636 = vpop.f32.mrb[0].mxu0
        %637 = vmatprep.mubr.bf16.mxu0 %v422
        %638 = vmatmul.mubr.bf16.gmra.mrb[0].mxu0 %v421
        %v639 = vpop.f32.mrb[0].mxu0
        %v640 = vadd.f32 %v315, %v639
        %v641 = vpop.f32.mrb[0].mxu0
        %v642 = vpop.f32.mrb[0].mxu0
        %v643 = vadd.f32 %v315, %v642
        %v644 = vpop.f32.mrb[0].mxu0
        %645 = vmatprep.mubr.bf16.mxu0 %v424
        %646 = vmatmul.mubr.bf16.gmra.mrb[0].mxu0 %v423
        %v647 = vpop.f32.mrb[0].mxu0
        %v648 = vadd.f32 %v315, %v647
        %v649 = vpop.f32.mrb[0].mxu0
        %v650 = vpop.f32.mrb[0].mxu0
        %v651 = vadd.f32 %v315, %v650
        %v652 = vpop.f32.mrb[0].mxu0
        %653 = vmatprep.mubr.bf16.mxu0 %v426
        %654 = vmatmul.mubr.bf16.gmra.mrb[0].mxu0 %v425
        %v655 = vpop.f32.mrb[0].mxu0
        %v656 = vadd.f32 %v315, %v655
        %v657 = vpop.f32.mrb[0].mxu0
        %v658 = vpop.f32.mrb[0].mxu0
        %v659 = vadd.f32 %v315, %v658
        %v660 = vpop.f32.mrb[0].mxu0
        %661 = vmatprep.mubr.bf16.mxu0 %v428
        %662 = vmatmul.mubr.bf16.gmra.mrb[0].mxu0 %v427
        %v663 = vpop.f32.mrb[0].mxu0
        %v664 = vadd.f32 %v315, %v663
        %v665 = vpop.f32.mrb[0].mxu0
        %v666 = vpop.f32.mrb[0].mxu0
        %v667 = vadd.f32 %v315, %v666
        %v668 = vpop.f32.mrb[0].mxu0
        %669 = vmatprep.mubr.bf16.mxu0 %v430
        %670 = vmatmul.mubr.bf16.gmra.mrb[0].mxu0 %v429
        %v671 = vpop.f32.mrb[0].mxu0
        %v672 = vadd.f32 %v315, %v671
        %v673 = vpop.f32.mrb[0].mxu0
        %v674 = vpop.f32.mrb[0].mxu0
        %v675 = vadd.f32 %v315, %v674
        %v676 = vpop.f32.mrb[0].mxu0
        %677 = vmatprep.mubr.bf16.mxu0 %v432
        %678 = vmatmul.mubr.bf16.gmra.mrb[0].mxu0 %v431
        %v679 = vpop.f32.mrb[0].mxu0
        %v680 = vadd.f32 %v315, %v679
        %v681 = vpop.f32.mrb[0].mxu0
        %v682 = vpop.f32.mrb[0].mxu0
        %v683 = vadd.f32 %v315, %v682
        %v684 = vpop.f32.mrb[0].mxu0
        %685 = vmatprep.mubr.bf16.mxu0 %v434
        %686 = vmatmul.mubr.bf16.gmra.mrb[0].mxu0 %v433
        %v687 = vpop.f32.mrb[0].mxu0
        %v688 = vadd.f32 %v315, %v687
        %v689 = vpop.f32.mrb[0].mxu0
        %v690 = vpop.f32.mrb[0].mxu0
        %v691 = vadd.f32 %v315, %v690
        %v692 = vpop.f32.mrb[0].mxu0
        %693 = vmatprep.mubr.bf16.mxu0 %v436
        %694 = vmatmul.mubr.bf16.gmra.mrb[0].mxu0 %v435
        %v695 = vpop.f32.mrb[0].mxu0
        %v696 = vadd.f32 %v315, %v695
        %v697 = vpop.f32.mrb[0].mxu0
        %v698 = vpop.f32.mrb[0].mxu0
        %v699 = vadd.f32 %v315, %v698
        %v700 = vpop.f32.mrb[0].mxu0
        %701 = vmatprep.mubr.bf16.mxu0 %v438
        %702 = vmatmul.mubr.bf16.gmra.mrb[0].mxu0 %v437
        %v703 = vpop.f32.mrb[0].mxu0
        %v704 = vadd.f32 %v315, %v703
        %v705 = vpop.f32.mrb[0].mxu0
        %v706 = vpop.f32.mrb[0].mxu0
        %v707 = vadd.f32 %v315, %v706
        %v708 = vpop.f32.mrb[0].mxu0
        %709 = vmatprep.mubr.bf16.mxu0 %v440
        %710 = vmatmul.mubr.bf16.gmra.mrb[0].mxu0 %v439
        %v711 = vpop.f32.mrb[0].mxu0
        %v712 = vadd.f32 %v315, %v711
        %v713 = vpop.f32.mrb[0].mxu0
        %v714 = vpop.f32.mrb[0].mxu0
        %v715 = vadd.f32 %v315, %v714
        %v716 = vpop.f32.mrb[0].mxu0
        %717 = vmatprep.mubr.bf16.mxu0 %v442
        %718 = vmatmul.mubr.bf16.gmra.mrb[0].mxu0 %v441
        %v719 = vpop.f32.mrb[0].mxu0
        %v720 = vadd.f32 %v315, %v719
        %v721 = vpop.f32.mrb[0].mxu0
        %v722 = vpop.f32.mrb[0].mxu0
        %v723 = vadd.f32 %v315, %v722
        %v724 = vpop.f32.mrb[0].mxu0
        %725 = vmatprep.mubr.bf16.mxu0 %v444
        %726 = vmatmul.mubr.bf16.gmra.mrb[0].mxu0 %v443
        %v727 = vpop.f32.mrb[0].mxu0
        %v728 = vadd.f32 %v315, %v727
        %v729 = vpop.f32.mrb[0].mxu0
        %v730 = vpop.f32.mrb[0].mxu0
        %v731 = vadd.f32 %v315, %v730
        %v732 = vpop.f32.mrb[0].mxu0
        %733 = vdwg.mxu0
        %v734 = vmax.f32 %v608, 0.0
        %v735 = vmax.f32 %v611, 0.0
        %v736 = vmax.f32 %v616, 0.0
        %v737 = vmax.f32 %v619, 0.0
        %v738 = vmax.f32 %v624, 0.0
        %v739 = vmax.f32 %v627, 0.0
        %v740 = vmax.f32 %v632, 0.0
        %v741 = vmax.f32 %v635, 0.0
        %v742 = vmax.f32 %v640, 0.0
        %v743 = vmax.f32 %v643, 0.0
        %v744 = vmax.f32 %v648, 0.0
        %v745 = vmax.f32 %v651, 0.0
        %v746 = vmax.f32 %v656, 0.0
        %v747 = vmax.f32 %v659, 0.0
        %v748 = vmax.f32 %v664, 0.0
        %v749 = vmax.f32 %v667, 0.0
        %v750 = vmax.f32 %v672, 0.0
        %v751 = vmax.f32 %v675, 0.0
        %v752 = vmax.f32 %v680, 0.0
        %v753 = vmax.f32 %v683, 0.0
        %v754 = vmax.f32 %v688, 0.0
        %v755 = vmax.f32 %v691, 0.0
        %v756 = vmax.f32 %v696, 0.0
        %v757 = vmax.f32 %v699, 0.0
        %v758 = vmax.f32 %v704, 0.0
        %v759 = vmax.f32 %v707, 0.0
        %v760 = vmax.f32 %v712, 0.0
        %v761 = vmax.f32 %v715, 0.0
        %v762 = vmax.f32 %v720, 0.0
        %v763 = vmax.f32 %v723, 0.0
        %v764 = vmax.f32 %v728, 0.0
        %v765 = vmax.f32 %v731, 0.0
        %v766 = vpack.c.bf16 %v735, %v734
        %v767 = vpack.c.bf16 %v737, %v736
        %v768 = vpack.c.bf16 %v739, %v738
        %v769 = vpack.c.bf16 %v741, %v740
        %v770 = vpack.c.bf16 %v743, %v742
        %v771 = vpack.c.bf16 %v745, %v744
        %v772 = vpack.c.bf16 %v747, %v746
        %v773 = vpack.c.bf16 %v749, %v748
        %v774 = vpack.c.bf16 %v751, %v750
        %v775 = vpack.c.bf16 %v753, %v752
        %v776 = vpack.c.bf16 %v755, %v754
        %v777 = vpack.c.bf16 %v757, %v756
        %v778 = vpack.c.bf16 %v759, %v758
        %v779 = vpack.c.bf16 %v761, %v760
        %v780 = vpack.c.bf16 %v763, %v762
        %v781 = vpack.c.bf16 %v765, %v764
        %v798 = vunpack.c.l.b16 %v766
        %v799 = vunpack.c.h.b16 %v766
        %v800 = vunpack.c.l.b16 %v767
        %v801 = vunpack.c.h.b16 %v767
        %v802 = vunpack.c.l.b16 %v768
        %v803 = vunpack.c.h.b16 %v768
        %v804 = vunpack.c.l.b16 %v769
        %v805 = vunpack.c.h.b16 %v769
        %v806 = vunpack.c.l.b16 %v770
        %v807 = vunpack.c.h.b16 %v770
        %v808 = vunpack.c.l.b16 %v771
        %v809 = vunpack.c.h.b16 %v771
        %v810 = vunpack.c.l.b16 %v772
        %v811 = vunpack.c.h.b16 %v772
        %v812 = vunpack.c.l.b16 %v773
        %v813 = vunpack.c.h.b16 %v773
        %v814 = vunpack.c.l.b16 %v774
        %v815 = vunpack.c.h.b16 %v774
        %v816 = vunpack.c.l.b16 %v775
        %v817 = vunpack.c.h.b16 %v775
        %v818 = vunpack.c.l.b16 %v776
        %v819 = vunpack.c.h.b16 %v776
        %v820 = vunpack.c.l.b16 %v777
        %v821 = vunpack.c.h.b16 %v777
        %v822 = vunpack.c.l.b16 %v778
        %v823 = vunpack.c.h.b16 %v778
        %v824 = vunpack.c.l.b16 %v779
        %v825 = vunpack.c.h.b16 %v779
        %v826 = vunpack.c.l.b16 %v780
        %v827 = vunpack.c.h.b16 %v780
        %v828 = vunpack.c.l.b16 %v781
        %v829 = vunpack.c.h.b16 %v781
        %v830 = vpack.c.b16 %v798, %v798
        %v831 = vpack.c.b16 %v799, %v799
        %v832 = vpack.c.b16 %v800, %v800
        %v833 = vpack.c.b16 %v801, %v801
        %v834 = vpack.c.b16 %v802, %v802
        %v835 = vpack.c.b16 %v803, %v803
        %v836 = vpack.c.b16 %v804, %v804
        %v837 = vpack.c.b16 %v805, %v805
        %v838 = vpack.c.b16 %v806, %v806
        %v839 = vpack.c.b16 %v807, %v807
        %v840 = vpack.c.b16 %v808, %v808
        %v841 = vpack.c.b16 %v809, %v809
        %v842 = vpack.c.b16 %v810, %v810
        %v843 = vpack.c.b16 %v811, %v811
        %v844 = vpack.c.b16 %v812, %v812
        %v845 = vpack.c.b16 %v813, %v813
        %v846 = vpack.c.b16 %v814, %v814
        %v847 = vpack.c.b16 %v815, %v815
        %v848 = vpack.c.b16 %v816, %v816
        %v849 = vpack.c.b16 %v817, %v817
        %v850 = vpack.c.b16 %v818, %v818
        %v851 = vpack.c.b16 %v819, %v819
        %v852 = vpack.c.b16 %v820, %v820
        %v853 = vpack.c.b16 %v821, %v821
        %v854 = vpack.c.b16 %v822, %v822
        %v855 = vpack.c.b16 %v823, %v823
        %v856 = vpack.c.b16 %v824, %v824
        %v857 = vpack.c.b16 %v825, %v825
        %v858 = vpack.c.b16 %v826, %v826
        %v859 = vpack.c.b16 %v827, %v827
        %v860 = vpack.c.b16 %v828, %v828
        %v861 = vpack.c.b16 %v829, %v829
        %vm894 = vcmask 519168
        %895 = vst.msk [vmem:[%s243] sm:$0xf] %vm894, %v830
        %896 = vst.msk [vmem:[%s243 + $0x4] sm:$0xf] %vm894, %v831
        %897 = vst.msk [vmem:[%s243 + $0x8] sm:$0xf] %vm894, %v832
        %898 = vst.msk [vmem:[%s243 + $0xc] sm:$0xf] %vm894, %v833
        %899 = vst.msk [vmem:[%s243 + $0x10] sm:$0xf] %vm894, %v834
        %900 = vst.msk [vmem:[%s243 + $0x14] sm:$0xf] %vm894, %v835
        %901 = vst.msk [vmem:[%s243 + $0x18] sm:$0xf] %vm894, %v836
        %902 = vst.msk [vmem:[%s243 + $0x1c] sm:$0xf] %vm894, %v837
        %903 = vst.msk [vmem:[%s243 + $0x20] sm:$0xf] %vm894, %v838
        %904 = vst.msk [vmem:[%s243 + $0x24] sm:$0xf] %vm894, %v839
        %905 = vst.msk [vmem:[%s243 + $0x28] sm:$0xf] %vm894, %v840
        %906 = vst.msk [vmem:[%s243 + $0x2c] sm:$0xf] %vm894, %v841
        %907 = vst.msk [vmem:[%s243 + $0x30] sm:$0xf] %vm894, %v842
        %908 = vst.msk [vmem:[%s243 + $0x34] sm:$0xf] %vm894, %v843
        %909 = vst.msk [vmem:[%s243 + $0x38] sm:$0xf] %vm894, %v844
        %910 = vst.msk [vmem:[%s243 + $0x3c] sm:$0xf] %vm894, %v845
        %911 = vst.msk [vmem:[%s243 + $0x40] sm:$0xf] %vm894, %v846
        %912 = vst.msk [vmem:[%s243 + $0x44] sm:$0xf] %vm894, %v847
        %913 = vst.msk [vmem:[%s243 + $0x48] sm:$0xf] %vm894, %v848
        %914 = vst.msk [vmem:[%s243 + $0x4c] sm:$0xf] %vm894, %v849
        %915 = vst.msk [vmem:[%s243 + $0x50] sm:$0xf] %vm894, %v850
        %916 = vst.msk [vmem:[%s243 + $0x54] sm:$0xf] %vm894, %v851
        %917 = vst.msk [vmem:[%s243 + $0x58] sm:$0xf] %vm894, %v852
        %918 = vst.msk [vmem:[%s243 + $0x5c] sm:$0xf] %vm894, %v853
        %919 = vst.msk [vmem:[%s243 + $0x60] sm:$0xf] %vm894, %v854
        %920 = vst.msk [vmem:[%s243 + $0x64] sm:$0xf] %vm894, %v855
        %921 = vst.msk [vmem:[%s243 + $0x68] sm:$0xf] %vm894, %v856
        %922 = vst.msk [vmem:[%s243 + $0x6c] sm:$0xf] %vm894, %v857
        %923 = vst.msk [vmem:[%s243 + $0x70] sm:$0xf] %vm894, %v858
        %924 = vst.msk [vmem:[%s243 + $0x74] sm:$0xf] %vm894, %v859
        %925 = vst.msk [vmem:[%s243 + $0x78] sm:$0xf] %vm894, %v860
        %926 = vst.msk [vmem:[%s243 + $0x7c] sm:$0xf] %vm894, %v861
        %s927 = smul.u32 32, %s21
        %p928 = scmp.lt.s32.totalorder %s927, 63
        %s929 = scalar_select %p928, %s927, 63
        %p930 = scmp.lt.s32.totalorder %s22, 0
        %s931 = scalar_select %p930, %s22, 0
        %s932 = sadd.s32 %s931, %s929
        %s933 = smul.addr %s932, 4
        %s934 = scalar_lea.vmem %s3, %s933
        // Predicated region
        $region37: #{tpu_custom_call.1} parent=31 // pred_check
          %p935 = pneg %p127
        $region38: #{tpu_custom_call.1} parent=31 // pred_check_branch
          %937 = sbr.rel (%p935) target = $region40
        $region39: #{tpu_custom_call.1} parent=31 // pred_region
          %s938 = smul.u32 32, %s21
        $region40: #{tpu_custom_call.1} parent=31 // pred_fallthru
          _
      $region32: #{tpu_custom_call.1} parent=5 // pred_fallthru
        _
      %p939 = scmp.le.s32.totalorder 2, %s12
      // Predicated region
      $region41: #{tpu_custom_call.1} parent=5 // pred_check
        %p940 = pneg %p939
      $region42: #{tpu_custom_call.1} parent=5 // pred_check_branch
        %942 = sbr.rel (%p940) target = $region44
      $region43: #{tpu_custom_call.1} parent=5 // pred_region
        %s943 = ssub.s32 %s12, 2
        // Predicated region
        $region45: #{tpu_custom_call.1} parent=43 // pred_check
          %p944 = pneg %p133
        $region46: #{tpu_custom_call.1} parent=43 // pred_check_branch
          %946 = sbr.rel (%p944) target = $region48
        $region47: #{tpu_custom_call.1} parent=43 // pred_region
          %s947 = smul.u32 32, %s23
          %p948 = scmp.lt.s32.totalorder %s947, 63
          %s949 = scalar_select %p948, %s947, 63
          %p950 = scmp.lt.s32.totalorder %s24, 0
          %s951 = scalar_select %p950, %s24, 0
          %s952 = sadd.s32 %s951, %s949
          %s953 = smul.addr %s952, 4
          %s954 = scalar_lea.vmem %s3, %s953
        $region48: #{tpu_custom_call.1} parent=43 // pred_fallthru
          _
      $region44: #{tpu_custom_call.1} parent=5 // pred_fallthru
        _
    $region6: #{tpu_custom_call.1} parent=1 // loop_footer
      %s16 = sadd.s32 1, %s12
    $region7: #{tpu_custom_call.1} parent=1 // loop_footer_branch
      %11 = sbr.rel target = $region3
    $region8: #{tpu_custom_call.1} parent=1 // loop_exit
      _
    %955 = vsyncpa [#allocation3], 1
    %s956 = scalar_lea.sflag [#allocation3], 1
    %957 = vsyncpa %s956, 1

</llo_original>
